<compile_context>
chip_gen: v7x
topology: tpu7x:2x2x1
jax: 0.10.0
libtpu: 0.0.40
codegen_flags: <defaults>
</compile_context>

<pallas_src>
import jax
import jax.numpy as jnp
from jax.experimental import pallas as pl
from jax.experimental.pallas import tpu as pltpu


def _mlp_kernel(x_ref, w1t_ref, b1_ref, w2t_ref, b2_ref, o_ref):
    # x:   [tb, in]      f32        w1t: [in, hidden] f32    b1: [1, hidden] f32
    # w2t: [hidden, out] f32        b2:  [1, out]     f32    o:  [tb, out]   f32
    h = jnp.dot(x_ref[...], w1t_ref[...], preferred_element_type=jnp.float32)
    h = jnp.maximum(h + b1_ref[...], 0.0)                     # bias + ReLU (f32 VPU)
    y = jnp.dot(h, w2t_ref[...], preferred_element_type=jnp.float32)
    o_ref[...] = (y + b2_ref[...]).astype(o_ref.dtype)


def _choose_batch_tile(B, tile_b):
    """Batch tile: multiple of 8 (sublane rule) or the full batch dim."""
    if B <= tile_b:
        half = (B // 2) // 8 * 8
        if half >= 1024:            # enough work: keep >= 2 grid steps (v7x megacore)
            return half
        return B                    # full-dim block (legal even when not /8)
    return max((tile_b // 8) * 8, 8)


def regression_model_forward(x, w1, b1, w2, b2, *, tile_b=16384, use_pallas=None):
    """Forward pass of RegressionModel.

    x : [B, in] float32
    w1: [hidden, in]  (torch linear1.weight layout),  b1: [hidden]
    w2: [out, hidden] (torch linear2.weight layout),  b2: [out]
    returns [B, out] float32
    """
    B, in_size = x.shape
    hidden = w1.shape[0]
    out_size = w2.shape[0]

    if use_pallas is None:
        use_pallas = B >= 2048
    if not use_pallas:
        # Tiny batches: a fused XLA expression beats kernel-launch + tile overheads.
        return jnp.maximum(x @ w1.T + b1, 0.0) @ w2.T + b2

    x = x.astype(jnp.float32)
    # One-off, tiny (10x32 / 4x10) reorientations so the kernel uses plain row-major
    # dots with no in-kernel transpose; this is not per-sample traffic.
    w1t = w1.T.astype(jnp.float32)                     # [in, hidden]
    w2t = w2.T.astype(jnp.float32)                     # [hidden, out]
    b1_row = b1.reshape(1, hidden).astype(jnp.float32)
    b2_row = b2.reshape(1, out_size).astype(jnp.float32)

    tb = _choose_batch_tile(B, tile_b)
    grid = (pl.cdiv(B, tb),)

    flops = 2 * B * (in_size * hidden + hidden * out_size)
    bytes_accessed = (x.size * 4 + w1t.size * 4 + w2t.size * 4
                      + b1_row.size * 4 + b2_row.size * 4 + B * out_size * 4)

    return pl.pallas_call(
        _mlp_kernel,
        out_shape=jax.ShapeDtypeStruct((B, out_size), jnp.float32),
        grid=grid,
        in_specs=[
            pl.BlockSpec((tb, in_size), lambda i: (i, 0)),       # x tile: pipelined
            pl.BlockSpec((in_size, hidden), lambda i: (0, 0)),   # weights: VMEM-resident
            pl.BlockSpec((1, hidden), lambda i: (0, 0)),
            pl.BlockSpec((hidden, out_size), lambda i: (0, 0)),
            pl.BlockSpec((1, out_size), lambda i: (0, 0)),
        ],
        out_specs=pl.BlockSpec((tb, out_size), lambda i: (i, 0)),
        compiler_params=pltpu.CompilerParams(
            dimension_semantics=("parallel",),
        ),
        cost_estimate=pl.CostEstimate(
            flops=flops, transcendentals=0, bytes_accessed=bytes_accessed),
    )(x, w1t, b1_row, w2t, b2_row)


def init_params(key, input_size, hidden_size, output_size):
    # PyTorch-style init in torch's native weight layout: W ~ U(-1/sqrt(fan_in), +).
    k1, k2, k3, k4 = jax.random.split(key, 4)
    bound1 = 1.0 / jnp.sqrt(input_size)
    bound2 = 1.0 / jnp.sqrt(hidden_size)
    w1 = jax.random.uniform(k1, (hidden_size, input_size), jnp.float32, -bound1, bound1)
    b1 = jax.random.uniform(k2, (hidden_size,), jnp.float32, -bound1, bound1)
    w2 = jax.random.uniform(k3, (output_size, hidden_size), jnp.float32, -bound2, bound2)
    b2 = jax.random.uniform(k4, (output_size,), jnp.float32, -bound2, bound2)
    return w1, b1, w2, b2


if __name__ == "__main__":
    input_size, hidden_size, output_size = 32, 10, 4
    batch = 8

    key = jax.random.PRNGKey(0)
    k_x, k_p = jax.random.split(key)
    x = jax.random.normal(k_x, (batch, input_size), dtype=jnp.float32)
    w1, b1, w2, b2 = init_params(k_p, input_size, hidden_size, output_size)

    # Force the Pallas path so the kernel itself is exercised at this small demo size.
    out = regression_model_forward(x, w1, b1, w2, b2, use_pallas=True)
    out = jax.block_until_ready(out)
    assert out.shape == (batch, output_size)

    # Pure-f32 reference (kernel is fully f32, so tolerance can be tight).
    ref = jnp.maximum(x @ w1.T + b1, 0.0) @ w2.T + b2
    assert jnp.allclose(out, ref, atol=1e-4, rtol=1e-4)

    # Gated entry point (small batch -> fused jnp fallback) must also agree.
    out_gated = jax.block_until_ready(regression_model_forward(x, w1, b1, w2, b2))
    assert jnp.allclose(out_gated, ref, atol=1e-4, rtol=1e-4)

    print("KERNEL_OK")
</pallas_src>

<mosaic_0001>
module attributes {stable_mosaic.version = 11 : i64} {
  func.func @_mlp_kernel(%arg0: i32, %arg1: memref<8x32xf32, #tpu.memory_space<vmem>>, %arg2: memref<32x10xf32, #tpu.memory_space<vmem>>, %arg3: memref<1x10xf32, #tpu.memory_space<vmem>>, %arg4: memref<10x4xf32, #tpu.memory_space<vmem>>, %arg5: memref<1x4xf32, #tpu.memory_space<vmem>>, %arg6: memref<8x4xf32, #tpu.memory_space<vmem>>) attributes {dimension_semantics = [#tpu.dimension_semantics<parallel>], iteration_bounds = array<i64: 1>, scalar_prefetch = 0 : i64, scratch_operands = 0 : i64, tpu.core_type = #tpu.core_type<tc>, window_params = [{transform_indices = @transform_0, window_bounds = array<i64: 8, 32>}, {pipeline_mode = #tpu.pipeline_mode<synchronous>, transform_indices = @transform_1, window_bounds = array<i64: 32, 10>}, {pipeline_mode = #tpu.pipeline_mode<synchronous>, transform_indices = @transform_2, window_bounds = array<i64: 1, 10>}, {pipeline_mode = #tpu.pipeline_mode<synchronous>, transform_indices = @transform_3, window_bounds = array<i64: 10, 4>}, {pipeline_mode = #tpu.pipeline_mode<synchronous>, transform_indices = @transform_4, window_bounds = array<i64: 1, 4>}, {transform_indices = @transform_5, window_bounds = array<i64: 8, 4>}]} {
    %c0 = arith.constant 0 : index
    %c0_0 = arith.constant 0 : index
    %0 = vector.load %arg1[%c0, %c0_0] : memref<8x32xf32, #tpu.memory_space<vmem>>, vector<8x32xf32>
    %c0_1 = arith.constant 0 : index
    %c0_2 = arith.constant 0 : index
    %1 = vector.load %arg2[%c0_1, %c0_2] : memref<32x10xf32, #tpu.memory_space<vmem>>, vector<32x10xf32>
    %cst = arith.constant dense<0.000000e+00> : vector<8x10xf32>
    %2 = tpu.matmul %0, %1, %cst {dimension_numbers = #tpu.dot_dimension_numbers<[1], [0], [0], [1], [0, 0, 1, 1], [], []>} : vector<8x32xf32>, vector<32x10xf32>, vector<8x10xf32> -> vector<8x10xf32>
    %c0_3 = arith.constant 0 : index
    %c0_4 = arith.constant 0 : index
    %3 = vector.load %arg3[%c0_3, %c0_4] : memref<1x10xf32, #tpu.memory_space<vmem>>, vector<1x10xf32>
    %4 = vector.broadcast %3 : vector<1x10xf32> to vector<8x10xf32>
    %5 = arith.addf %2, %4 : vector<8x10xf32>
    %cst_5 = arith.constant 0.000000e+00 : f32
    %6 = vector.broadcast %cst_5 : f32 to vector<8x10xf32>
    %7 = arith.maximumf %5, %6 : vector<8x10xf32>
    %c0_6 = arith.constant 0 : index
    %c0_7 = arith.constant 0 : index
    %8 = vector.load %arg4[%c0_6, %c0_7] : memref<10x4xf32, #tpu.memory_space<vmem>>, vector<10x4xf32>
    %cst_8 = arith.constant dense<0.000000e+00> : vector<8x4xf32>
    %9 = tpu.matmul %7, %8, %cst_8 {dimension_numbers = #tpu.dot_dimension_numbers<[1], [0], [0], [1], [0, 0, 1, 1], [], []>} : vector<8x10xf32>, vector<10x4xf32>, vector<8x4xf32> -> vector<8x4xf32>
    %c0_9 = arith.constant 0 : index
    %c0_10 = arith.constant 0 : index
    %10 = vector.load %arg5[%c0_9, %c0_10] : memref<1x4xf32, #tpu.memory_space<vmem>>, vector<1x4xf32>
    %11 = vector.broadcast %10 : vector<1x4xf32> to vector<8x4xf32>
    %12 = arith.addf %9, %11 : vector<8x4xf32>
    %c0_11 = arith.constant 0 : index
    %c0_12 = arith.constant 0 : index
    %13 = vector.load %arg6[%c0_11, %c0_12] : memref<8x4xf32, #tpu.memory_space<vmem>>, vector<8x4xf32>
    tpu.vector_store %arg6[%c0_11, %c0_12], %12 {strides = array<i32>} : memref<8x4xf32, #tpu.memory_space<vmem>>, vector<8x4xf32>,
    return
  }
  func.func @transform_0(%arg0: i32) -> (i32, i32) {
    %c0_i32 = arith.constant 0 : i32
    %c0_i32_0 = arith.constant 0 : i32
    return %arg0, %c0_i32 : i32, i32
  }
  func.func @transform_1(%arg0: i32) -> (i32, i32) {
    %c0_i32 = arith.constant 0 : i32
    %c0_i32_0 = arith.constant 0 : i32
    %c0_i32_1 = arith.constant 0 : i32
    return %c0_i32, %c0_i32_0 : i32, i32
  }
  func.func @transform_2(%arg0: i32) -> (i32, i32) {
    %c0_i32 = arith.constant 0 : i32
    %c0_i32_0 = arith.constant 0 : i32
    %c0_i32_1 = arith.constant 0 : i32
    return %c0_i32, %c0_i32_0 : i32, i32
  }
  func.func @transform_3(%arg0: i32) -> (i32, i32) {
    %c0_i32 = arith.constant 0 : i32
    %c0_i32_0 = arith.constant 0 : i32
    %c0_i32_1 = arith.constant 0 : i32
    return %c0_i32, %c0_i32_0 : i32, i32
  }
  func.func @transform_4(%arg0: i32) -> (i32, i32) {
    %c0_i32 = arith.constant 0 : i32
    %c0_i32_0 = arith.constant 0 : i32
    %c0_i32_1 = arith.constant 0 : i32
    return %c0_i32, %c0_i32_0 : i32, i32
  }
  func.func @transform_5(%arg0: i32) -> (i32, i32) {
    %c0_i32 = arith.constant 0 : i32
    %c0_i32_0 = arith.constant 0 : i32
    return %arg0, %c0_i32 : i32, i32
  }
}

</mosaic_0001>

<llo_original>
// kernel: tpu_custom_call.1
$region0: #{tpu_custom_call.1}
  #allocation0 [shape = 'u32[]', space=smem, size = 0x4, offset = 0x4, fixed_abs, tag = 'smem constant byte address 0x4 - core index']
  #allocation1 [shape = 'u32[144,128]{1,0:T(1,128)}', space=vmem, size = 0x12000, scoped, tag = 'internal scratch']
  %s0 = inlined_call_operand.vmem [shape: f32[8,32], index: 0, kind: input, shape index: {}]
  %s1 = inlined_call_operand.vmem [shape: f32[32,10], index: 1, kind: input, shape index: {}]
  %s2 = inlined_call_operand.vmem [shape: f32[1,10], index: 2, kind: input, shape index: {}]
  %s3 = inlined_call_operand.vmem [shape: f32[10,4], index: 3, kind: input, shape index: {}]
  %s4 = inlined_call_operand.vmem [shape: f32[1,4], index: 4, kind: input, shape index: {}]
  %s5 = inlined_call_operand.vmem [shape: f32[8,4], index: 5, kind: output, shape index: {}]
  %s6 = sld [smem:[#allocation0]]
  $region30: #{tpu_custom_call.1} parent=0
    _
  %s8 = ssub.s32 1, %s6
  %s9 = scalar_select 0, %s8, %s6
  // Predicated region
  $region2: #{tpu_custom_call.1} parent=0 // pred_check
    _
  $region3: #{tpu_custom_call.1} parent=0 // pred_check_branch
    %11 = sbr.rel (0) target = $region5
  $region4: #{tpu_custom_call.1} parent=0 // pred_region
    _
  $region5: #{tpu_custom_call.1} parent=0 // pred_fallthru
    _
  // Predicated region
  $region6: #{tpu_custom_call.1} parent=0 // pred_check
    _
  $region7: #{tpu_custom_call.1} parent=0 // pred_check_branch
    %13 = sbr.rel (0) target = $region9
  $region8: #{tpu_custom_call.1} parent=0 // pred_region
    _
  $region9: #{tpu_custom_call.1} parent=0 // pred_fallthru
    _
  // Predicated region
  $region10: #{tpu_custom_call.1} parent=0 // pred_check
    _
  $region11: #{tpu_custom_call.1} parent=0 // pred_check_branch
    %15 = sbr.rel (0) target = $region13
  $region12: #{tpu_custom_call.1} parent=0 // pred_region
    _
  $region13: #{tpu_custom_call.1} parent=0 // pred_fallthru
    _
  // Predicated region
  $region14: #{tpu_custom_call.1} parent=0 // pred_check
    _
  $region15: #{tpu_custom_call.1} parent=0 // pred_check_branch
    %17 = sbr.rel (0) target = $region17
  $region16: #{tpu_custom_call.1} parent=0 // pred_region
    _
  $region17: #{tpu_custom_call.1} parent=0 // pred_fallthru
    _
  // Predicated region
  $region18: #{tpu_custom_call.1} parent=0 // pred_check
    _
  $region19: #{tpu_custom_call.1} parent=0 // pred_check_branch
    %19 = sbr.rel (0) target = $region21
  $region20: #{tpu_custom_call.1} parent=0 // pred_region
    _
  $region21: #{tpu_custom_call.1} parent=0 // pred_fallthru
    _
  %v20 = vld [vmem:[%s0] sm:$0xff]
  %v21 = vld [vmem:[%s1] sm:$0xff]
  %v22 = vld [vmem:[%s1 + $0x8] sm:$0xff]
  %v23 = vld [vmem:[%s1 + $0x10] sm:$0xff]
  %v24 = vld [vmem:[%s1 + $0x18] sm:$0xff]
  %v25 = vld [vmem:[%s2] sm:$0x1]
  %v27 = vlaneseq
  %v28 = vshrl.u32 %v27, 7
  %v29 = vsub.s32 0, %v28
  %v30 = vrot.slane %v25, %v29
  %vm32 = vcmask 261120
  %v34 = vsel %vm32, %v20, 0
  %36 = vmatprep.subr.mxu0 0.0
  %37 = vmatpush1.msra.mxu0 %v21
  %38 = vmatprep.subr.mxu0 0.0
  %39 = vmatpush1.msra.mxu0 %v22
  %40 = vmatprep.subr.mxu0 0.0
  %41 = vmatpush1.msra.mxu0 %v23
  %42 = vmatprep.subr.mxu0 0.0
  %43 = vmatpush1.msra.mxu0 %v24
  %44 = vmatprep.subr.mxu0 0.0
  %45 = vmatpush1.msra.mxu0 0.0
  %46 = vmatprep.subr.mxu0 0.0
  %47 = vmatpush1.msra.mxu0 0.0
  %48 = vmatprep.subr.mxu0 0.0
  %49 = vmatpush1.msra.mxu0 0.0
  %50 = vmatprep.subr.mxu0 0.0
  %51 = vmatpush1.msra.mxu0 0.0
  %52 = vmatprep.subr.mxu0 0.0
  %53 = vmatpush1.msra.mxu0 0.0
  %54 = vmatprep.subr.mxu0 0.0
  %55 = vmatpush1.msra.mxu0 0.0
  %56 = vmatprep.subr.mxu0 0.0
  %57 = vmatpush1.msra.mxu0 0.0
  %58 = vmatprep.subr.mxu0 0.0
  %59 = vmatpush1.msra.mxu0 0.0
  %60 = vmatprep.subr.mxu0 0.0
  %61 = vmatpush1.msra.mxu0 0.0
  %62 = vmatprep.subr.mxu0 0.0
  %63 = vmatpush1.msra.mxu0 0.0
  %64 = vmatprep.subr.mxu0 0.0
  %65 = vmatpush1.msra.mxu0 0.0
  %66 = vmatprep.subr.mxu0 0.0
  %67 = vmatpush1.msra.mxu0 0.0
  %68 = vmatprep.subr.mxu0 0.0
  %69 = vmatpush1.msra.mxu0 0.0
  %70 = vmatprep.subr.mxu0 0.0
  %71 = vmatpush1.msra.mxu0 0.0
  %72 = vmatprep.subr.mxu0 0.0
  %73 = vmatpush1.msra.mxu0 0.0
  %74 = vmatprep.subr.mxu0 0.0
  %75 = vmatpush1.msra.mxu0 0.0
  %76 = vmatprep.subr.mxu0 0.0
  %77 = vmatpush1.msra.mxu0 0.0
  %78 = vmatprep.subr.mxu0 0.0
  %79 = vmatpush1.msra.mxu0 0.0
  %80 = vmatprep.subr.mxu0 0.0
  %81 = vmatpush1.msra.mxu0 0.0
  %82 = vmatprep.subr.mxu0 0.0
  %83 = vmatpush1.msra.mxu0 0.0
  %84 = vmatprep.subr.mxu0 0.0
  %85 = vmatpush1.msra.mxu0 0.0
  %86 = vmatprep.subr.mxu0 0.0
  %87 = vmatpush1.msra.mxu0 0.0
  %88 = vmatprep.subr.mxu0 0.0
  %89 = vmatpush1.msra.mxu0 0.0
  %90 = vmatprep.subr.mxu0 0.0
  %91 = vmatpush1.msra.mxu0 0.0
  %92 = vmatprep.subr.mxu0 0.0
  %93 = vmatpush1.msra.mxu0 0.0
  %94 = vmatprep.subr.mxu0 0.0
  %95 = vmatpush1.msra.mxu0 0.0
  %96 = vmatprep.subr.mxu0 0.0
  %97 = vmatpush1.msra.mxu0 0.0
  %98 = vmatprep.subr.mxu0 0.0
  %99 = vmatpush1.msra.mxu0 0.0
  %100 = vmatprep.mubr.f32.mxu0 0.0
  %101 = vmatmul.mubr.f32.gmra.mrb[0].mxu0 %v34
  %v102 = vpop.f32.mrb[0].mxu0
  %v103 = vadd.f32 %v30, %v102
  %v104 = vpop.f32.mrb[0].mxu0
  %105 = vdwg.mxu0
  %v106 = vmax.f32 %v103, 0.0
  %v107 = vld [vmem:[%s3] sm:$0xff]
  %v108 = vld [vmem:[%s3 + $0x8] sm:$0x3]
  %v109 = vld [vmem:[%s4] sm:$0x1]
  %v111 = vlaneseq
  %v112 = vshrl.u32 %v111, 7
  %v113 = vsub.s32 0, %v112
  %v114 = vrot.slane %v109, %v113
  %vm116 = vcmask 80896
  %v118 = vsel %vm116, %v106, 0
  %vm120 = vcmask 1041408
  %v122 = vsel %vm120, %v108, 0
  %124 = vmatprep.subr.mxu0 0.0
  %125 = vmatpush1.msra.mxu0 %v107
  %126 = vmatprep.subr.mxu0 0.0
  %127 = vmatpush1.msra.mxu0 %v122
  %128 = vmatprep.subr.mxu0 0.0
  %129 = vmatpush1.msra.mxu0 0.0
  %130 = vmatprep.subr.mxu0 0.0
  %131 = vmatpush1.msra.mxu0 0.0
  %132 = vmatprep.subr.mxu0 0.0
  %133 = vmatpush1.msra.mxu0 0.0
  %134 = vmatprep.subr.mxu0 0.0
  %135 = vmatpush1.msra.mxu0 0.0
  %136 = vmatprep.subr.mxu0 0.0
  %137 = vmatpush1.msra.mxu0 0.0
  %138 = vmatprep.subr.mxu0 0.0
  %139 = vmatpush1.msra.mxu0 0.0
  %140 = vmatprep.subr.mxu0 0.0
  %141 = vmatpush1.msra.mxu0 0.0
  %142 = vmatprep.subr.mxu0 0.0
  %143 = vmatpush1.msra.mxu0 0.0
  %144 = vmatprep.subr.mxu0 0.0
  %145 = vmatpush1.msra.mxu0 0.0
  %146 = vmatprep.subr.mxu0 0.0
  %147 = vmatpush1.msra.mxu0 0.0
  %148 = vmatprep.subr.mxu0 0.0
  %149 = vmatpush1.msra.mxu0 0.0
  %150 = vmatprep.subr.mxu0 0.0
  %151 = vmatpush1.msra.mxu0 0.0
  %152 = vmatprep.subr.mxu0 0.0
  %153 = vmatpush1.msra.mxu0 0.0
  %154 = vmatprep.subr.mxu0 0.0
  %155 = vmatpush1.msra.mxu0 0.0
  %156 = vmatprep.subr.mxu0 0.0
  %157 = vmatpush1.msra.mxu0 0.0
  %158 = vmatprep.subr.mxu0 0.0
  %159 = vmatpush1.msra.mxu0 0.0
  %160 = vmatprep.subr.mxu0 0.0
  %161 = vmatpush1.msra.mxu0 0.0
  %162 = vmatprep.subr.mxu0 0.0
  %163 = vmatpush1.msra.mxu0 0.0
  %164 = vmatprep.subr.mxu0 0.0
  %165 = vmatpush1.msra.mxu0 0.0
  %166 = vmatprep.subr.mxu0 0.0
  %167 = vmatpush1.msra.mxu0 0.0
  %168 = vmatprep.subr.mxu0 0.0
  %169 = vmatpush1.msra.mxu0 0.0
  %170 = vmatprep.subr.mxu0 0.0
  %171 = vmatpush1.msra.mxu0 0.0
  %172 = vmatprep.subr.mxu0 0.0
  %173 = vmatpush1.msra.mxu0 0.0
  %174 = vmatprep.subr.mxu0 0.0
  %175 = vmatpush1.msra.mxu0 0.0
  %176 = vmatprep.subr.mxu0 0.0
  %177 = vmatpush1.msra.mxu0 0.0
  %178 = vmatprep.subr.mxu0 0.0
  %179 = vmatpush1.msra.mxu0 0.0
  %180 = vmatprep.subr.mxu0 0.0
  %181 = vmatpush1.msra.mxu0 0.0
  %182 = vmatprep.subr.mxu0 0.0
  %183 = vmatpush1.msra.mxu0 0.0
  %184 = vmatprep.subr.mxu0 0.0
  %185 = vmatpush1.msra.mxu0 0.0
  %186 = vmatprep.subr.mxu0 0.0
  %187 = vmatpush1.msra.mxu0 0.0
  %188 = vmatprep.mubr.f32.mxu0 0.0
  %189 = vmatmul.mubr.f32.gmra.mrb[0].mxu0 %v118
  %v190 = vpop.f32.mrb[0].mxu0
  %v191 = vadd.f32 %v114, %v190
  %v192 = vpop.f32.mrb[0].mxu0
  %193 = vdwg.mxu0
  %vm194 = vcmask 31744
  %195 = vst.msk [vmem:[%s5] sm:$0xff] %vm194, %v191
  // Predicated region
  $region22: #{tpu_custom_call.1} parent=0 // pred_check
    _
  $region23: #{tpu_custom_call.1} parent=0 // pred_check_branch
    %197 = sbr.rel (0) target = $region25
  $region24: #{tpu_custom_call.1} parent=0 // pred_region
    _
  $region25: #{tpu_custom_call.1} parent=0 // pred_fallthru
    _
  // Predicated region
  $region26: #{tpu_custom_call.1} parent=0 // pred_check
    _
  $region27: #{tpu_custom_call.1} parent=0 // pred_check_branch
    %199 = sbr.rel (0) target = $region29
  $region28: #{tpu_custom_call.1} parent=0 // pred_region
    _
  $region29: #{tpu_custom_call.1} parent=0 // pred_fallthru
    _

</llo_original>
